<compile_context>
chip_gen: v6e
topology: v6e:2x2x1
jax: 0.10.0
libtpu: 0.0.40
codegen_flags: <defaults>
</compile_context>

<pallas_src>
import functools

import jax
import jax.numpy as jnp
from jax.experimental import pallas as pl
from jax.experimental.pallas import tpu as pltpu


# ----------------------------------------------------------------------------
# Generation-aware VMEM budget / tiling knobs
# ----------------------------------------------------------------------------
def _vmem_capacity_bytes():
    try:
        return int(pltpu.get_tpu_info().vmem_capacity_bytes)
    except Exception:
        # Conservative fallback (v7x-sized VMEM) so limits are always legal.
        return 64 * 1024 * 1024


_VMEM_CAP = _vmem_capacity_bytes()
_SMALL_VMEM = _VMEM_CAP <= 64 * 1024 * 1024          # v7x-class TensorCore
# Leave headroom for compiler-internal scratch and double-buffering.
_VMEM_LIMIT = (40 if _SMALL_VMEM else 96) * 1024 * 1024

_TEACHER_TK_CANDS = (1024, 512, 256, 128) if _SMALL_VMEM \
    else (2048, 1024, 512, 256, 128)
_LOSS_TB_CANDS = (256, 128, 64, 32, 16, 8) if _SMALL_VMEM \
    else (512, 256, 128, 64, 32, 16, 8)


def _pick_tile(n, candidates):
    """Largest candidate tile that evenly divides n; fall back to full extent."""
    for t in candidates:
        if t <= n and n % t == 0:
            return t
    return n


# ----------------------------------------------------------------------------
# Kernel 1: teacher model forward (B/K/D tiled MXU matmul, bf16 in-kernel cast)
# ----------------------------------------------------------------------------
def _teacher_matmul_kernel(x_ref, w_ref, b_ref, o_ref, acc_ref):
    k = pl.program_id(2)  # reduction step over D (last grid axis)

    @pl.when(k == 0)
    def _():
        acc_ref[...] = jnp.zeros_like(acc_ref)

    # f32 tiles streamed from HBM once; cast to bf16 here (no wrapper pass).
    acc_ref[...] += jnp.dot(x_ref[...].astype(jnp.bfloat16),
                            w_ref[...].astype(jnp.bfloat16),
                            preferred_element_type=jnp.float32)

    @pl.when(k == pl.num_programs(2) - 1)
    def _():
        o_ref[...] = (acc_ref[...] +
                      b_ref[...].astype(jnp.float32)).astype(o_ref.dtype)


def teacher_forward(x_flat, w, b):
    """x_flat: (B, D), w: (D, K), b: (1, K)  ->  (B, K) bf16 teacher logits."""
    B, D = x_flat.shape
    K = w.shape[1]
    tm = _pick_tile(B, (256, 128, 64, 32, 16, 8))   # batch tile (bounds VMEM)
    tk = _pick_tile(D, _TEACHER_TK_CANDS)           # reduction tile along D
    tn = _pick_tile(K, (256, 128))                  # output tile along K
    grid = (B // tm, K // tn, D // tk)              # reduction axis last

    return pl.pallas_call(
        _teacher_matmul_kernel,
        out_shape=jax.ShapeDtypeStruct((B, K), jnp.bfloat16),
        grid_spec=pltpu.PrefetchScalarGridSpec(
            num_scalar_prefetch=0,
            grid=grid,
            in_specs=[
                pl.BlockSpec((tm, tk), lambda i, j, k: (i, k)),   # activations
                pl.BlockSpec((tk, tn), lambda i, j, k: (k, j)),   # weight stream
                pl.BlockSpec((1, tn), lambda i, j, k: (0, j)),    # bias
            ],
            out_specs=pl.BlockSpec((tm, tn), lambda i, j, k: (i, j)),
            scratch_shapes=[pltpu.VMEM((tm, tn), jnp.float32)],
        ),
        compiler_params=pltpu.CompilerParams(
            dimension_semantics=("parallel", "parallel", "arbitrary"),
            vmem_limit_bytes=_VMEM_LIMIT,
        ),
    )(x_flat, w, b)


# ----------------------------------------------------------------------------
# Kernel 2: fused loss (base CE + soft/hard distillation), batch-tiled
# ----------------------------------------------------------------------------
def _log_softmax(z):
    m = jnp.max(z, axis=-1, keepdims=True)
    e = jnp.exp(z - m)
    s = jnp.sum(e, axis=-1, keepdims=True)
    return z - m - jnp.log(s)


def _ce_rowsum(logits_f32, labels_i32, lane):
    """Sum over the tile of per-row cross-entropy; returns a (1, 1) array."""
    log_p = _log_softmax(logits_f32)
    onehot = (lane == labels_i32).astype(jnp.float32)
    return jnp.sum(-log_p * onehot, axis=(0, 1), keepdims=True)


def _ce_only_kernel(outputs_ref, labels_ref, o_ref, base_acc, *, batch):
    b = pl.program_id(0)

    @pl.when(b == 0)
    def _():
        base_acc[...] = jnp.zeros_like(base_acc)

    outputs = outputs_ref[...].astype(jnp.float32)
    tb, K = outputs.shape
    lane = jax.lax.broadcasted_iota(jnp.int32, (tb, K), 1)
    base_acc[...] += _ce_rowsum(outputs, labels_ref[...], lane)

    @pl.when(b == pl.num_programs(0) - 1)
    def _():
        o_ref[...] = base_acc[...] / batch


def _distill_loss_kernel(outputs_ref, kd_ref, teacher_ref, labels_ref, o_ref,
                         base_acc, dist_acc, *, distillation_type, alpha, tau,
                         batch):
    b = pl.program_id(0)

    @pl.when(b == 0)
    def _():
        base_acc[...] = jnp.zeros_like(base_acc)
        dist_acc[...] = jnp.zeros_like(dist_acc)

    outputs = outputs_ref[...].astype(jnp.float32)   # (tb, K) class-token logits
    kd = kd_ref[...].astype(jnp.float32)             # (tb, K) dist-token logits
    teacher = teacher_ref[...].astype(jnp.float32)   # (tb, K) teacher logits (bf16 in HBM)
    labels = labels_ref[...]                         # (tb, 1) int32

    tb, K = outputs.shape
    # Single lane-iota per tile, reused by the base CE and the hard path
    # (JAX does not CSE broadcast_in_dim).
    lane = jax.lax.broadcasted_iota(jnp.int32, (tb, K), 1)

    # base_criterion: F.cross_entropy(outputs, labels), reduction='mean'
    base_acc[...] += _ce_rowsum(outputs, labels, lane)

    if distillation_type == "soft":
        T = tau
        ls = _log_softmax(kd / T)        # log_softmax(outputs_kd / T)
        lt = _log_softmax(teacher / T)   # log_softmax(teacher   / T)
        pt = jnp.exp(lt)                 # exact teacher softmax (HBM-bound kernel)
        # F.kl_div(input=ls, target=lt, log_target=True): exp(lt) * (lt - ls)
        dist_acc[...] += jnp.sum(pt * (lt - ls), axis=(0, 1), keepdims=True)
    else:  # 'hard'
        # teacher argmax (first-occurrence tie-break), then CE(kd, argmax).
        tmax = jnp.max(teacher, axis=-1, keepdims=True)
        first_idx = jnp.min(
            jnp.where(teacher == tmax, lane, K), axis=-1, keepdims=True)
        onehot_t = (lane == first_idx).astype(jnp.float32)
        log_pkd = _log_softmax(kd)
        dist_acc[...] += jnp.sum(-log_pkd * onehot_t, axis=(0, 1),
                                 keepdims=True)

    @pl.when(b == pl.num_programs(0) - 1)
    def _():
        base_loss = base_acc[...] / batch
        if distillation_type == "soft":
            # kl_avg='batchmean' -> sum / batch, scaled by T^2
            dist_loss = dist_acc[...] / batch * (tau * tau)
        else:
            dist_loss = dist_acc[...] / batch
        o_ref[...] = base_loss * (1.0 - alpha) + dist_loss * alpha


# ----------------------------------------------------------------------------
# Wrapper mirroring DistillationLoss.forward
# ----------------------------------------------------------------------------
def distillation_loss(inputs, outputs, labels, teacher_w, teacher_b, *,
                      distillation_type="soft", alpha=0.5, tau=1.0):
    assert distillation_type in ("none", "soft", "hard")
    outputs_kd = None
    if isinstance(outputs, (tuple, list)):
        outputs, outputs_kd = outputs
    B, K = outputs.shape

    labels2d = labels.reshape(B, 1).astype(jnp.int32)
    tb = _pick_tile(B, _LOSS_TB_CANDS)   # batch tile (generation-aware cap)
    grid = (B // tb,)
    loss_params = pltpu.CompilerParams(
        dimension_semantics=("arbitrary",), vmem_limit_bytes=_VMEM_LIMIT)

    if distillation_type == "none":
        # Base CE only: no teacher forward, no zero-filled / duplicated inputs.
        kernel = functools.partial(_ce_only_kernel, batch=float(B))
        loss = pl.pallas_call(
            kernel,
            out_shape=jax.ShapeDtypeStruct((1, 1), jnp.float32),
            grid_spec=pltpu.PrefetchScalarGridSpec(
                num_scalar_prefetch=0,
                grid=grid,
                in_specs=[
                    pl.BlockSpec((tb, K), lambda b: (b, 0)),
                    pl.BlockSpec((tb, 1), lambda b: (b, 0)),
                ],
                out_specs=pl.BlockSpec((1, 1), lambda b: (0, 0)),
                scratch_shapes=[pltpu.VMEM((1, 1), jnp.float32)],
            ),
            compiler_params=loss_params,
        )(outputs, labels2d)
        return loss[0, 0]

    if outputs_kd is None:
        raise ValueError(
            "When knowledge distillation is enabled, the model is expected "
            "to return a Tuple[Tensor, Tensor] with the output of the "
            "class_token and the dist_token")

    # Teacher forward (inference-only): f32 streamed once, bf16 cast in-kernel,
    # bf16 logits written back (halves writeback + loss-kernel teacher read).
    x_flat = inputs.reshape(B, -1)
    b2d = teacher_b.reshape(1, K).astype(jnp.float32)
    teacher_logits = teacher_forward(x_flat, teacher_w, b2d)

    # Loss kernel: student logits in their native dtype, teacher in bf16;
    # everything is upcast to f32 inside the kernel.
    kernel = functools.partial(
        _distill_loss_kernel, distillation_type=distillation_type,
        alpha=float(alpha), tau=float(tau), batch=float(B))
    loss = pl.pallas_call(
        kernel,
        out_shape=jax.ShapeDtypeStruct((1, 1), jnp.float32),
        grid_spec=pltpu.PrefetchScalarGridSpec(
            num_scalar_prefetch=0,
            grid=grid,
            in_specs=[
                pl.BlockSpec((tb, K), lambda b: (b, 0)),
                pl.BlockSpec((tb, K), lambda b: (b, 0)),
                pl.BlockSpec((tb, K), lambda b: (b, 0)),
                pl.BlockSpec((tb, 1), lambda b: (b, 0)),
            ],
            out_specs=pl.BlockSpec((1, 1), lambda b: (0, 0)),
            scratch_shapes=[pltpu.VMEM((1, 1), jnp.float32),
                            pltpu.VMEM((1, 1), jnp.float32)],
        ),
        compiler_params=loss_params,
    )(outputs, outputs_kd, teacher_logits, labels2d)
    return loss[0, 0]

    # TODO(synk): optionally fuse the teacher matmul into the loss kernel
    # (D-reduction grid axis + (tb, K) logits scratch) to drop the HBM
    # round-trip of the teacher logits when B is small.
    # TODO(synk): on v7x (2 TCs) add a leading parallel grid axis to the loss
    # kernel emitting per-half partial sums combined in the wrapper, so both
    # TensorCores stream the HBM-bound loss inputs.


# ----------------------------------------------------------------------------
if __name__ == "__main__":
    B, C, H, W, K = 2, 4, 16, 16, 128            # D = C*H*W = 1024, K = 128
    D = C * H * W

    key = jax.random.PRNGKey(0)
    k1, k2, k3, k4, k5 = jax.random.split(key, 5)

    inputs = jax.random.normal(k1, (B, C, H, W), jnp.float32)   # NCHW
    outputs = jax.random.normal(k2, (B, K), jnp.float32)        # class-token logits
    outputs_kd = jax.random.normal(k3, (B, K), jnp.float32)     # dist-token logits
    labels = jax.random.randint(k4, (B,), 0, K, dtype=jnp.int32)

    # deterministic teacher parameters (synthetic, not a checkpoint)
    teacher_w = jax.random.normal(k5, (D, K), jnp.float32) * 0.02
    teacher_b = jnp.zeros((1, K), jnp.float32)

    loss_soft = distillation_loss(
        inputs, (outputs, outputs_kd), labels, teacher_w, teacher_b,
        distillation_type="soft", alpha=0.5, tau=3.0)
    loss_hard = distillation_loss(
        inputs, (outputs, outputs_kd), labels, teacher_w, teacher_b,
        distillation_type="hard", alpha=0.5, tau=3.0)
    loss_none = distillation_loss(
        inputs, (outputs, outputs_kd), labels, teacher_w, teacher_b,
        distillation_type="none", alpha=0.5, tau=3.0)

    jax.block_until_ready((loss_soft, loss_hard, loss_none))
    print("KERNEL_OK")
</pallas_src>

<mosaic_0001>
module attributes {stable_mosaic.version = 11 : i64} {
  func.func @_teacher_matmul_kernel(%arg0: i32, %arg1: i32, %arg2: i32, %arg3: memref<2x1024xf32, #tpu.memory_space<vmem>>, %arg4: memref<1024x128xf32, #tpu.memory_space<vmem>>, %arg5: memref<1x128xf32, #tpu.memory_space<vmem>>, %arg6: memref<2x128xbf16, #tpu.memory_space<vmem>>, %arg7: memref<2x128xf32, #tpu.memory_space<vmem>>) attributes {dimension_semantics = [#tpu.dimension_semantics<parallel>, #tpu.dimension_semantics<parallel>, #tpu.dimension_semantics<arbitrary>], iteration_bounds = array<i64: 1, 1, 1>, scalar_prefetch = 0 : i64, scratch_operands = 1 : i64, tpu.core_type = #tpu.core_type<tc>, window_params = [{transform_indices = @transform_0, window_bounds = array<i64: 2, 1024>}, {transform_indices = @transform_1, window_bounds = array<i64: 1024, 128>}, {transform_indices = @transform_2, window_bounds = array<i64: 1, 128>}, {transform_indices = @transform_3, window_bounds = array<i64: 2, 128>}]} {
    %c0_i32 = arith.constant 0 : i32
    %0 = arith.cmpi eq, %arg2, %c0_i32 : i32
    %1 = arith.extui %0 : i1 to i32
    %c0_i32_0 = arith.constant 0 : i32
    %2 = arith.cmpi ne, %1, %c0_i32_0 : i32
    scf.if %2 {
      %cst_10 = arith.constant 0.000000e+00 : f32
      %14 = vector.broadcast %cst_10 : f32 to vector<2x128xf32>
      %c0_11 = arith.constant 0 : index
      %c0_12 = arith.constant 0 : index
      %15 = vector.load %arg7[%c0_11, %c0_12] : memref<2x128xf32, #tpu.memory_space<vmem>>, vector<2x128xf32>
      tpu.vector_store %arg7[%c0_11, %c0_12], %14 {strides = array<i32>} : memref<2x128xf32, #tpu.memory_space<vmem>>, vector<2x128xf32>,
    } else {
    }
    %c0 = arith.constant 0 : index
    %c0_1 = arith.constant 0 : index
    %3 = vector.load %arg7[%c0, %c0_1] : memref<2x128xf32, #tpu.memory_space<vmem>>, vector<2x128xf32>
    %c0_2 = arith.constant 0 : index
    %c0_3 = arith.constant 0 : index
    %4 = vector.load %arg3[%c0_2, %c0_3] : memref<2x1024xf32, #tpu.memory_space<vmem>>, vector<2x1024xf32>
    %5 = arith.truncf %4 : vector<2x1024xf32> to vector<2x1024xbf16>
    %c0_4 = arith.constant 0 : index
    %c0_5 = arith.constant 0 : index
    %6 = vector.load %arg4[%c0_4, %c0_5] : memref<1024x128xf32, #tpu.memory_space<vmem>>, vector<1024x128xf32>
    %7 = arith.truncf %6 : vector<1024x128xf32> to vector<1024x128xbf16>
    %cst = arith.constant dense<0.000000e+00> : vector<2x128xf32>
    %8 = tpu.matmul %5, %7, %cst {dimension_numbers = #tpu.dot_dimension_numbers<[1], [0], [0], [1], [0, 0, 1, 1], [], []>} : vector<2x1024xbf16>, vector<1024x128xbf16>, vector<2x128xf32> -> vector<2x128xf32>
    %9 = arith.addf %3, %8 : vector<2x128xf32>
    %c0_6 = arith.constant 0 : index
    %c0_7 = arith.constant 0 : index
    %10 = vector.load %arg7[%c0_6, %c0_7] : memref<2x128xf32, #tpu.memory_space<vmem>>, vector<2x128xf32>
    tpu.vector_store %arg7[%c0_6, %c0_7], %9 {strides = array<i32>} : memref<2x128xf32, #tpu.memory_space<vmem>>, vector<2x128xf32>,
    %c0_i32_8 = arith.constant 0 : i32
    %11 = arith.cmpi eq, %arg2, %c0_i32_8 : i32
    %12 = arith.extui %11 : i1 to i32
    %c0_i32_9 = arith.constant 0 : i32
    %13 = arith.cmpi ne, %12, %c0_i32_9 : i32
    scf.if %13 {
      %c0_10 = arith.constant 0 : index
      %c0_11 = arith.constant 0 : index
      %14 = vector.load %arg7[%c0_10, %c0_11] : memref<2x128xf32, #tpu.memory_space<vmem>>, vector<2x128xf32>
      %c0_12 = arith.constant 0 : index
      %c0_13 = arith.constant 0 : index
      %15 = vector.load %arg5[%c0_12, %c0_13] : memref<1x128xf32, #tpu.memory_space<vmem>>, vector<1x128xf32>
      %16 = vector.broadcast %15 : vector<1x128xf32> to vector<2x128xf32>
      %17 = arith.addf %14, %16 : vector<2x128xf32>
      %18 = arith.truncf %17 : vector<2x128xf32> to vector<2x128xbf16>
      %c0_14 = arith.constant 0 : index
      %c0_15 = arith.constant 0 : index
      %19 = vector.load %arg6[%c0_14, %c0_15] : memref<2x128xbf16, #tpu.memory_space<vmem>>, vector<2x128xbf16>
      tpu.vector_store %arg6[%c0_14, %c0_15], %18 {strides = array<i32>} : memref<2x128xbf16, #tpu.memory_space<vmem>>, vector<2x128xbf16>,
    } else {
    }
    return
  }
  func.func @transform_0(%arg0: i32, %arg1: i32, %arg2: i32) -> (i32, i32) {
    %c0_i32 = arith.constant 0 : i32
    return %arg0, %arg2 : i32, i32
  }
  func.func @transform_1(%arg0: i32, %arg1: i32, %arg2: i32) -> (i32, i32) {
    %c0_i32 = arith.constant 0 : i32
    return %arg2, %arg1 : i32, i32
  }
  func.func @transform_2(%arg0: i32, %arg1: i32, %arg2: i32) -> (i32, i32) {
    %c0_i32 = arith.constant 0 : i32
    %c0_i32_0 = arith.constant 0 : i32
    return %c0_i32, %arg1 : i32, i32
  }
  func.func @transform_3(%arg0: i32, %arg1: i32, %arg2: i32) -> (i32, i32) {
    %c0_i32 = arith.constant 0 : i32
    return %arg0, %arg1 : i32, i32
  }
}

</mosaic_0001>

<llo_original>
// kernel: tpu_custom_call.1
$region0: #{tpu_custom_call.1}
  #allocation0 [shape = 'u32[]', space=smem, size = 0x4, offset = 0x4, fixed_abs, tag = 'smem constant byte address 0x4 - core index']
  #allocation1 [shape = 'u32[144,128]{1,0:T(1,128)}', space=vmem, size = 0x12000, scoped, tag = 'internal scratch']
  #allocation2 [shape = 'f32[2,128]{1,0:T(2,128)}', space=vmem, size = 0x400, scoped, tag = 'scratch operand']
  %s0 = inlined_call_operand.hbm [shape: f32[2,1024], index: 0, kind: input, shape index: {}]
  %s1 = inlined_call_operand.hbm [shape: f32[1024,128], index: 1, kind: input, shape index: {}]
  %s2 = inlined_call_operand.vmem [shape: f32[1,128], index: 2, kind: input, shape index: {}]
  %s3 = inlined_call_operand.hbm [shape: bf16[2,128], index: 3, kind: output, shape index: {}]
  %s4 = sld [smem:[#allocation0]]
  $region38: #{tpu_custom_call.1} parent=0
    _
  %s6 = ssub.s32 1, %s4
  %s7 = scalar_select 0, %s6, %s4
  $region1: #{tpu_custom_call.1} parent=0
    #allocation3 [shape = 'u8[8192]{0}', space=vmem, size = 0x2000, scoped, tag = 'input window, operand 0, single buffered']
    #allocation4 [shape = 's32[1]{0}', space=sflag, size = 0x4, scoped, tag = 'scoped memory for tpu_custom_call.1']
    #allocation5 [shape = 's32[1]{0}', space=sflag, size = 0x4, scoped, tag = 'scoped memory for tpu_custom_call.1']
    #allocation6 [shape = 'u8[524288]{0}', space=vmem, size = 0x80000, scoped, tag = 'input window, operand 1, single buffered']
    #allocation7 [shape = 's32[1]{0}', space=sflag, size = 0x4, scoped, tag = 'scoped memory for tpu_custom_call.1']
    #allocation8 [shape = 'u8[512]{0}', space=vmem, size = 0x400, scoped, tag = 'output window, operand 0, single buffered']
    %8 = vsyncpa [#allocation4], 0
    %9 = vsyncpa [#allocation7], 0
    %10 = vsyncpa [#allocation5], 0
    // Predicated region
    $region2: #{tpu_custom_call.1} parent=1 // pred_check
      _
    $region3: #{tpu_custom_call.1} parent=1 // pred_check_branch
      %12 = sbr.rel (0) target = $region5
    $region4: #{tpu_custom_call.1} parent=1 // pred_region
      %s14 = ssub.s32 256, 256
      %15 = vsyncadd [#allocation4], %s14
      %s17 = sshll.u32 [#allocation3], 4
      %s18 = int_to_ptr.vmem [resolvable:$true] %s17
      %20 = dma.hbm_to_vmem [thread:$0]  %s0, 256, %s18, [#allocation4]
    $region5: #{tpu_custom_call.1} parent=1 // pred_fallthru
      _
    // Predicated region
    $region6: #{tpu_custom_call.1} parent=1 // pred_check
      _
    $region7: #{tpu_custom_call.1} parent=1 // pred_check_branch
      %22 = sbr.rel (0) target = $region9
    $region8: #{tpu_custom_call.1} parent=1 // pred_region
      %s24 = ssub.s32 16384, 16384
      %25 = vsyncadd [#allocation7], %s24
      %s26 = sshll.u32 [#allocation6], 4
      %s27 = int_to_ptr.vmem [resolvable:$true] %s26
      %32 = dma.hbm_to_vmem [thread:$0]  %s1, 16384, %s27, [#allocation7], 128, 128, 8
    $region9: #{tpu_custom_call.1} parent=1 // pred_fallthru
      _
    // Predicated region
    $region10: #{tpu_custom_call.1} parent=1 // pred_check
      _
    $region11: #{tpu_custom_call.1} parent=1 // pred_check_branch
      %34 = sbr.rel (0) target = $region13
    $region12: #{tpu_custom_call.1} parent=1 // pred_region
      _
    $region13: #{tpu_custom_call.1} parent=1 // pred_fallthru
      _
    // Predicated region
    $region14: #{tpu_custom_call.1} parent=1 // pred_check
      _
    $region15: #{tpu_custom_call.1} parent=1 // pred_check_branch
      %36 = sbr.rel (0) target = $region17
    $region16: #{tpu_custom_call.1} parent=1 // pred_region
      %37 = dma.done [#allocation4], 256
    $region17: #{tpu_custom_call.1} parent=1 // pred_fallthru
      _
    // Predicated region
    $region18: #{tpu_custom_call.1} parent=1 // pred_check
      _
    $region19: #{tpu_custom_call.1} parent=1 // pred_check_branch
      %39 = sbr.rel (0) target = $region21
    $region20: #{tpu_custom_call.1} parent=1 // pred_region
      %40 = dma.done [#allocation7], 16384
    $region21: #{tpu_custom_call.1} parent=1 // pred_fallthru
      _
    %p42 = scmp.eq.s32.totalorder 0, 0
    // Predicated region
    $region22: #{tpu_custom_call.1} parent=1 // pred_check
      %p43 = pneg %p42
    $region23: #{tpu_custom_call.1} parent=1 // pred_check_branch
      %45 = sbr.rel (%p43) target = $region25
    $region24: #{tpu_custom_call.1} parent=1 // pred_region
      %46 = vst [vmem:[#allocation2] sm:$0x3] 0.0
    $region25: #{tpu_custom_call.1} parent=1 // pred_fallthru
      _
    %v47 = vld [vmem:[#allocation2] sm:$0x3]
    %v48 = vld [vmem:[#allocation3] sm:$0xff]
    %v49 = vld [vmem:[#allocation3 + $0x8] sm:$0xff]
    %v52 = vcombine.high %v48, %v48
    %v54 = vunpack.c.l.s4 1983009808
    %v55 = vunpack.c.0.s8 %v54
    %v56 = vlaneseq
    %v57 = vshrl.u32 %v56, 7
    %v58 = vsub.s32 %v55, %v57
    %v59 = vrot.slane %v48, %v58
    %v61 = vunpack.c.l.s4 1983009808
    %v62 = vunpack.c.0.s8 %v61
    %v63 = vlaneseq
    %v64 = vshrl.u32 %v63, 7
    %v65 = vsub.s32 %v62, %v64
    %v66 = vrot.slane %v52, %v65
    %v67 = vcombine.high %v59, %v59
    %v68 = vcombine.high %v66, %v66
    %v69 = vcombine.high %v49, %v49
    %v71 = vunpack.c.l.s4 1983009808
    %v72 = vunpack.c.0.s8 %v71
    %v73 = vlaneseq
    %v74 = vshrl.u32 %v73, 7
    %v75 = vsub.s32 %v72, %v74
    %v76 = vrot.slane %v49, %v75
    %v78 = vunpack.c.l.s4 1983009808
    %v79 = vunpack.c.0.s8 %v78
    %v80 = vlaneseq
    %v81 = vshrl.u32 %v80, 7
    %v82 = vsub.s32 %v79, %v81
    %v83 = vrot.slane %v69, %v82
    %v84 = vcombine.high %v76, %v76
    %v85 = vcombine.high %v83, %v83
    %v94 = vpack.c.bf16 %v59, %v59
    %v95 = vpack.c.bf16 %v67, %v67
    %v96 = vpack.c.bf16 %v66, %v66
    %v97 = vpack.c.bf16 %v68, %v68
    %v98 = vpack.c.bf16 %v76, %v76
    %v99 = vpack.c.bf16 %v84, %v84
    %v100 = vpack.c.bf16 %v83, %v83
    %v101 = vpack.c.bf16 %v85, %v85
    %v102 = vld [vmem:[#allocation6] sm:$0xff]
    %v103 = vld [vmem:[#allocation6 + $0x8] sm:$0xff]
    %v104 = vld [vmem:[#allocation6 + $0x10] sm:$0xff]
    %v105 = vld [vmem:[#allocation6 + $0x18] sm:$0xff]
    %v106 = vld [vmem:[#allocation6 + $0x20] sm:$0xff]
    %v107 = vld [vmem:[#allocation6 + $0x28] sm:$0xff]
    %v108 = vld [vmem:[#allocation6 + $0x30] sm:$0xff]
    %v109 = vld [vmem:[#allocation6 + $0x38] sm:$0xff]
    %v110 = vld [vmem:[#allocation6 + $0x40] sm:$0xff]
    %v111 = vld [vmem:[#allocation6 + $0x48] sm:$0xff]
    %v112 = vld [vmem:[#allocation6 + $0x50] sm:$0xff]
    %v113 = vld [vmem:[#allocation6 + $0x58] sm:$0xff]
    %v114 = vld [vmem:[#allocation6 + $0x60] sm:$0xff]
    %v115 = vld [vmem:[#allocation6 + $0x68] sm:$0xff]
    %v116 = vld [vmem:[#allocation6 + $0x70] sm:$0xff]
    %v117 = vld [vmem:[#allocation6 + $0x78] sm:$0xff]
    %v118 = vld [vmem:[#allocation6 + $0x80] sm:$0xff]
    %v119 = vld [vmem:[#allocation6 + $0x88] sm:$0xff]
    %v120 = vld [vmem:[#allocation6 + $0x90] sm:$0xff]
    %v121 = vld [vmem:[#allocation6 + $0x98] sm:$0xff]
    %v122 = vld [vmem:[#allocation6 + $0xa0] sm:$0xff]
    %v123 = vld [vmem:[#allocation6 + $0xa8] sm:$0xff]
    %v124 = vld [vmem:[#allocation6 + $0xb0] sm:$0xff]
    %v125 = vld [vmem:[#allocation6 + $0xb8] sm:$0xff]
    %v126 = vld [vmem:[#allocation6 + $0xc0] sm:$0xff]
    %v127 = vld [vmem:[#allocation6 + $0xc8] sm:$0xff]
    %v128 = vld [vmem:[#allocation6 + $0xd0] sm:$0xff]
    %v129 = vld [vmem:[#allocation6 + $0xd8] sm:$0xff]
    %v130 = vld [vmem:[#allocation6 + $0xe0] sm:$0xff]
    %v131 = vld [vmem:[#allocation6 + $0xe8] sm:$0xff]
    %v132 = vld [vmem:[#allocation6 + $0xf0] sm:$0xff]
    %v133 = vld [vmem:[#allocation6 + $0xf8] sm:$0xff]
    %v134 = vld [vmem:[#allocation6 + $0x100] sm:$0xff]
    %v135 = vld [vmem:[#allocation6 + $0x108] sm:$0xff]
    %v136 = vld [vmem:[#allocation6 + $0x110] sm:$0xff]
    %v137 = vld [vmem:[#allocation6 + $0x118] sm:$0xff]
    %v138 = vld [vmem:[#allocation6 + $0x120] sm:$0xff]
    %v139 = vld [vmem:[#allocation6 + $0x128] sm:$0xff]
    %v140 = vld [vmem:[#allocation6 + $0x130] sm:$0xff]
    %v141 = vld [vmem:[#allocation6 + $0x138] sm:$0xff]
    %v142 = vld [vmem:[#allocation6 + $0x140] sm:$0xff]
    %v143 = vld [vmem:[#allocation6 + $0x148] sm:$0xff]
    %v144 = vld [vmem:[#allocation6 + $0x150] sm:$0xff]
    %v145 = vld [vmem:[#allocation6 + $0x158] sm:$0xff]
    %v146 = vld [vmem:[#allocation6 + $0x160] sm:$0xff]
    %v147 = vld [vmem:[#allocation6 + $0x168] sm:$0xff]
    %v148 = vld [vmem:[#allocation6 + $0x170] sm:$0xff]
    %v149 = vld [vmem:[#allocation6 + $0x178] sm:$0xff]
    %v150 = vld [vmem:[#allocation6 + $0x180] sm:$0xff]
    %v151 = vld [vmem:[#allocation6 + $0x188] sm:$0xff]
    %v152 = vld [vmem:[#allocation6 + $0x190] sm:$0xff]
    %v153 = vld [vmem:[#allocation6 + $0x198] sm:$0xff]
    %v154 = vld [vmem:[#allocation6 + $0x1a0] sm:$0xff]
    %v155 = vld [vmem:[#allocation6 + $0x1a8] sm:$0xff]
    %v156 = vld [vmem:[#allocation6 + $0x1b0] sm:$0xff]
    %v157 = vld [vmem:[#allocation6 + $0x1b8] sm:$0xff]
    %v158 = vld [vmem:[#allocation6 + $0x1c0] sm:$0xff]
    %v159 = vld [vmem:[#allocation6 + $0x1c8] sm:$0xff]
    %v160 = vld [vmem:[#allocation6 + $0x1d0] sm:$0xff]
    %v161 = vld [vmem:[#allocation6 + $0x1d8] sm:$0xff]
    %v162 = vld [vmem:[#allocation6 + $0x1e0] sm:$0xff]
    %v163 = vld [vmem:[#allocation6 + $0x1e8] sm:$0xff]
    %v164 = vld [vmem:[#allocation6 + $0x1f0] sm:$0xff]
    %v165 = vld [vmem:[#allocation6 + $0x1f8] sm:$0xff]
    %v166 = vld [vmem:[#allocation6 + $0x200] sm:$0xff]
    %v167 = vld [vmem:[#allocation6 + $0x208] sm:$0xff]
    %v168 = vld [vmem:[#allocation6 + $0x210] sm:$0xff]
    %v169 = vld [vmem:[#allocation6 + $0x218] sm:$0xff]
    %v170 = vld [vmem:[#allocation6 + $0x220] sm:$0xff]
    %v171 = vld [vmem:[#allocation6 + $0x228] sm:$0xff]
    %v172 = vld [vmem:[#allocation6 + $0x230] sm:$0xff]
    %v173 = vld [vmem:[#allocation6 + $0x238] sm:$0xff]
    %v174 = vld [vmem:[#allocation6 + $0x240] sm:$0xff]
    %v175 = vld [vmem:[#allocation6 + $0x248] sm:$0xff]
    %v176 = vld [vmem:[#allocation6 + $0x250] sm:$0xff]
    %v177 = vld [vmem:[#allocation6 + $0x258] sm:$0xff]
    %v178 = vld [vmem:[#allocation6 + $0x260] sm:$0xff]
    %v179 = vld [vmem:[#allocation6 + $0x268] sm:$0xff]
    %v180 = vld [vmem:[#allocation6 + $0x270] sm:$0xff]
    %v181 = vld [vmem:[#allocation6 + $0x278] sm:$0xff]
    %v182 = vld [vmem:[#allocation6 + $0x280] sm:$0xff]
    %v183 = vld [vmem:[#allocation6 + $0x288] sm:$0xff]
    %v184 = vld [vmem:[#allocation6 + $0x290] sm:$0xff]
    %v185 = vld [vmem:[#allocation6 + $0x298] sm:$0xff]
    %v186 = vld [vmem:[#allocation6 + $0x2a0] sm:$0xff]
    %v187 = vld [vmem:[#allocation6 + $0x2a8] sm:$0xff]
    %v188 = vld [vmem:[#allocation6 + $0x2b0] sm:$0xff]
    %v189 = vld [vmem:[#allocation6 + $0x2b8] sm:$0xff]
    %v190 = vld [vmem:[#allocation6 + $0x2c0] sm:$0xff]
    %v191 = vld [vmem:[#allocation6 + $0x2c8] sm:$0xff]
    %v192 = vld [vmem:[#allocation6 + $0x2d0] sm:$0xff]
    %v193 = vld [vmem:[#allocation6 + $0x2d8] sm:$0xff]
    %v194 = vld [vmem:[#allocation6 + $0x2e0] sm:$0xff]
    %v195 = vld [vmem:[#allocation6 + $0x2e8] sm:$0xff]
    %v196 = vld [vmem:[#allocation6 + $0x2f0] sm:$0xff]
    %v197 = vld [vmem:[#allocation6 + $0x2f8] sm:$0xff]
    %v198 = vld [vmem:[#allocation6 + $0x300] sm:$0xff]
    %v199 = vld [vmem:[#allocation6 + $0x308] sm:$0xff]
    %v200 = vld [vmem:[#allocation6 + $0x310] sm:$0xff]
    %v201 = vld [vmem:[#allocation6 + $0x318] sm:$0xff]
    %v202 = vld [vmem:[#allocation6 + $0x320] sm:$0xff]
    %v203 = vld [vmem:[#allocation6 + $0x328] sm:$0xff]
    %v204 = vld [vmem:[#allocation6 + $0x330] sm:$0xff]
    %v205 = vld [vmem:[#allocation6 + $0x338] sm:$0xff]
    %v206 = vld [vmem:[#allocation6 + $0x340] sm:$0xff]
    %v207 = vld [vmem:[#allocation6 + $0x348] sm:$0xff]
    %v208 = vld [vmem:[#allocation6 + $0x350] sm:$0xff]
    %v209 = vld [vmem:[#allocation6 + $0x358] sm:$0xff]
    %v210 = vld [vmem:[#allocation6 + $0x360] sm:$0xff]
    %v211 = vld [vmem:[#allocation6 + $0x368] sm:$0xff]
    %v212 = vld [vmem:[#allocation6 + $0x370] sm:$0xff]
    %v213 = vld [vmem:[#allocation6 + $0x378] sm:$0xff]
    %v214 = vld [vmem:[#allocation6 + $0x380] sm:$0xff]
    %v215 = vld [vmem:[#allocation6 + $0x388] sm:$0xff]
    %v216 = vld [vmem:[#allocation6 + $0x390] sm:$0xff]
    %v217 = vld [vmem:[#allocation6 + $0x398] sm:$0xff]
    %v218 = vld [vmem:[#allocation6 + $0x3a0] sm:$0xff]
    %v219 = vld [vmem:[#allocation6 + $0x3a8] sm:$0xff]
    %v220 = vld [vmem:[#allocation6 + $0x3b0] sm:$0xff]
    %v221 = vld [vmem:[#allocation6 + $0x3b8] sm:$0xff]
    %v222 = vld [vmem:[#allocation6 + $0x3c0] sm:$0xff]
    %v223 = vld [vmem:[#allocation6 + $0x3c8] sm:$0xff]
    %v224 = vld [vmem:[#allocation6 + $0x3d0] sm:$0xff]
    %v225 = vld [vmem:[#allocation6 + $0x3d8] sm:$0xff]
    %v226 = vld [vmem:[#allocation6 + $0x3e0] sm:$0xff]
    %v227 = vld [vmem:[#allocation6 + $0x3e8] sm:$0xff]
    %v228 = vld [vmem:[#allocation6 + $0x3f0] sm:$0xff]
    %v229 = vld [vmem:[#allocation6 + $0x3f8] sm:$0xff]
    %v230 = vpack.c.bf16 %v103, %v102
    %v231 = vpack.c.bf16 %v105, %v104
    %v232 = vpack.c.bf16 %v107, %v106
    %v233 = vpack.c.bf16 %v109, %v108
    %v234 = vpack.c.bf16 %v111, %v110
    %v235 = vpack.c.bf16 %v113, %v112
    %v236 = vpack.c.bf16 %v115, %v114
    %v237 = vpack.c.bf16 %v117, %v116
    %v238 = vpack.c.bf16 %v119, %v118
    %v239 = vpack.c.bf16 %v121, %v120
    %v240 = vpack.c.bf16 %v123, %v122
    %v241 = vpack.c.bf16 %v125, %v124
    %v242 = vpack.c.bf16 %v127, %v126
    %v243 = vpack.c.bf16 %v129, %v128
    %v244 = vpack.c.bf16 %v131, %v130
    %v245 = vpack.c.bf16 %v133, %v132
    %v246 = vpack.c.bf16 %v135, %v134
    %v247 = vpack.c.bf16 %v137, %v136
    %v248 = vpack.c.bf16 %v139, %v138
    %v249 = vpack.c.bf16 %v141, %v140
    %v250 = vpack.c.bf16 %v143, %v142
    %v251 = vpack.c.bf16 %v145, %v144
    %v252 = vpack.c.bf16 %v147, %v146
    %v253 = vpack.c.bf16 %v149, %v148
    %v254 = vpack.c.bf16 %v151, %v150
    %v255 = vpack.c.bf16 %v153, %v152
    %v256 = vpack.c.bf16 %v155, %v154
    %v257 = vpack.c.bf16 %v157, %v156
    %v258 = vpack.c.bf16 %v159, %v158
    %v259 = vpack.c.bf16 %v161, %v160
    %v260 = vpack.c.bf16 %v163, %v162
    %v261 = vpack.c.bf16 %v165, %v164
    %v262 = vpack.c.bf16 %v167, %v166
    %v263 = vpack.c.bf16 %v169, %v168
    %v264 = vpack.c.bf16 %v171, %v170
    %v265 = vpack.c.bf16 %v173, %v172
    %v266 = vpack.c.bf16 %v175, %v174
    %v267 = vpack.c.bf16 %v177, %v176
    %v268 = vpack.c.bf16 %v179, %v178
    %v269 = vpack.c.bf16 %v181, %v180
    %v270 = vpack.c.bf16 %v183, %v182
    %v271 = vpack.c.bf16 %v185, %v184
    %v272 = vpack.c.bf16 %v187, %v186
    %v273 = vpack.c.bf16 %v189, %v188
    %v274 = vpack.c.bf16 %v191, %v190
    %v275 = vpack.c.bf16 %v193, %v192
    %v276 = vpack.c.bf16 %v195, %v194
    %v277 = vpack.c.bf16 %v197, %v196
    %v278 = vpack.c.bf16 %v199, %v198
    %v279 = vpack.c.bf16 %v201, %v200
    %v280 = vpack.c.bf16 %v203, %v202
    %v281 = vpack.c.bf16 %v205, %v204
    %v282 = vpack.c.bf16 %v207, %v206
    %v283 = vpack.c.bf16 %v209, %v208
    %v284 = vpack.c.bf16 %v211, %v210
    %v285 = vpack.c.bf16 %v213, %v212
    %v286 = vpack.c.bf16 %v215, %v214
    %v287 = vpack.c.bf16 %v217, %v216
    %v288 = vpack.c.bf16 %v219, %v218
    %v289 = vpack.c.bf16 %v221, %v220
    %v290 = vpack.c.bf16 %v223, %v222
    %v291 = vpack.c.bf16 %v225, %v224
    %v292 = vpack.c.bf16 %v227, %v226
    %v293 = vpack.c.bf16 %v229, %v228
    %294 = vmatprep.subr.bf16.mxu0 0
    %295 = vmatpush1.bf16.msra.mxu0 %v237
    %296 = vmatprep.subr.bf16.mxu0 0
    %297 = vmatpush1.bf16.msra.mxu0 %v236
    %298 = vmatprep.subr.bf16.mxu0 0
    %299 = vmatpush1.bf16.msra.mxu0 %v235
    %300 = vmatprep.subr.bf16.mxu0 0
    %301 = vmatpush1.bf16.msra.mxu0 %v234
    %302 = vmatprep.subr.bf16.mxu0 0
    %303 = vmatpush1.bf16.msra.mxu0 %v233
    %304 = vmatprep.subr.bf16.mxu0 0
    %305 = vmatpush1.bf16.msra.mxu0 %v232
    %306 = vmatprep.subr.bf16.mxu0 0
    %307 = vmatpush1.bf16.msra.mxu0 %v231
    %308 = vmatprep.subr.bf16.mxu0 0
    %309 = vmatpush1.bf16.msra.mxu0 %v230
    %310 = vmatprep.subr.bf16.mxu0 0
    %311 = vmatpush2.bf16.msra.mxu0 %v245
    %312 = vmatprep.subr.bf16.mxu0 0
    %313 = vmatpush2.bf16.msra.mxu0 %v244
    %314 = vmatprep.subr.bf16.mxu0 0
    %315 = vmatpush2.bf16.msra.mxu0 %v243
    %316 = vmatprep.subr.bf16.mxu0 0
    %317 = vmatpush2.bf16.msra.mxu0 %v242
    %318 = vmatprep.subr.bf16.mxu0 0
    %319 = vmatpush2.bf16.msra.mxu0 %v241
    %320 = vmatprep.subr.bf16.mxu0 0
    %321 = vmatpush2.bf16.msra.mxu0 %v240
    %322 = vmatprep.subr.bf16.mxu0 0
    %323 = vmatpush2.bf16.msra.mxu0 %v239
    %324 = vmatprep.subr.bf16.mxu0 0
    %325 = vmatpush2.bf16.msra.mxu0 %v238
    %326 = vmatprep.mubr.bf16.mxu0 %v95
    %327 = vmatmul.mubr.bf16.gmra.mxu0 %v94
    %v328 = vpop.f32.mrf.mxu0
    %v329 = vadd.f32 0.0, %v328
    %v330 = vpop.f32.mrf.mxu0
    %v331 = vpop.f32.mrf.mxu0
    %v332 = vpop.f32.mrf.mxu0
    %333 = vdwg.mxu0
    %334 = vmatprep.subr.bf16.mxu0 0
    %335 = vmatpush1.bf16.msra.mxu0 %v253
    %336 = vmatprep.subr.bf16.mxu0 0
    %337 = vmatpush1.bf16.msra.mxu0 %v252
    %338 = vmatprep.subr.bf16.mxu0 0
    %339 = vmatpush1.bf16.msra.mxu0 %v251
    %340 = vmatprep.subr.bf16.mxu0 0
    %341 = vmatpush1.bf16.msra.mxu0 %v250
    %342 = vmatprep.subr.bf16.mxu0 0
    %343 = vmatpush1.bf16.msra.mxu0 %v249
    %344 = vmatprep.subr.bf16.mxu0 0
    %345 = vmatpush1.bf16.msra.mxu0 %v248
    %346 = vmatprep.subr.bf16.mxu0 0
    %347 = vmatpush1.bf16.msra.mxu0 %v247
    %348 = vmatprep.subr.bf16.mxu0 0
    %349 = vmatpush1.bf16.msra.mxu0 %v246
    %350 = vmatprep.subr.bf16.mxu0 0
    %351 = vmatpush2.bf16.msra.mxu0 %v261
    %352 = vmatprep.subr.bf16.mxu0 0
    %353 = vmatpush2.bf16.msra.mxu0 %v260
    %354 = vmatprep.subr.bf16.mxu0 0
    %355 = vmatpush2.bf16.msra.mxu0 %v259
    %356 = vmatprep.subr.bf16.mxu0 0
    %357 = vmatpush2.bf16.msra.mxu0 %v258
    %358 = vmatprep.subr.bf16.mxu0 0
    %359 = vmatpush2.bf16.msra.mxu0 %v257
    %360 = vmatprep.subr.bf16.mxu0 0
    %361 = vmatpush2.bf16.msra.mxu0 %v256
    %362 = vmatprep.subr.bf16.mxu0 0
    %363 = vmatpush2.bf16.msra.mxu0 %v255
    %364 = vmatprep.subr.bf16.mxu0 0
    %365 = vmatpush2.bf16.msra.mxu0 %v254
    %366 = vmatprep.mubr.bf16.mxu0 %v97
    %367 = vmatmul.mubr.bf16.gmra.mxu0 %v96
    %v368 = vpop.f32.mrf.mxu0
    %v369 = vadd.f32 %v329, %v368
    %v370 = vpop.f32.mrf.mxu0
    %v371 = vpop.f32.mrf.mxu0
    %v372 = vpop.f32.mrf.mxu0
    %373 = vdwg.mxu0
    %374 = vmatprep.subr.bf16.mxu0 0
    %375 = vmatpush1.bf16.msra.mxu0 %v269
    %376 = vmatprep.subr.bf16.mxu0 0
    %377 = vmatpush1.bf16.msra.mxu0 %v268
    %378 = vmatprep.subr.bf16.mxu0 0
    %379 = vmatpush1.bf16.msra.mxu0 %v267
    %380 = vmatprep.subr.bf16.mxu0 0
    %381 = vmatpush1.bf16.msra.mxu0 %v266
    %382 = vmatprep.subr.bf16.mxu0 0
    %383 = vmatpush1.bf16.msra.mxu0 %v265
    %384 = vmatprep.subr.bf16.mxu0 0
    %385 = vmatpush1.bf16.msra.mxu0 %v264
    %386 = vmatprep.subr.bf16.mxu0 0
    %387 = vmatpush1.bf16.msra.mxu0 %v263
    %388 = vmatprep.subr.bf16.mxu0 0
    %389 = vmatpush1.bf16.msra.mxu0 %v262
    %390 = vmatprep.subr.bf16.mxu0 0
    %391 = vmatpush2.bf16.msra.mxu0 %v277
    %392 = vmatprep.subr.bf16.mxu0 0
    %393 = vmatpush2.bf16.msra.mxu0 %v276
    %394 = vmatprep.subr.bf16.mxu0 0
    %395 = vmatpush2.bf16.msra.mxu0 %v275
    %396 = vmatprep.subr.bf16.mxu0 0
    %397 = vmatpush2.bf16.msra.mxu0 %v274
    %398 = vmatprep.subr.bf16.mxu0 0
    %399 = vmatpush2.bf16.msra.mxu0 %v273
    %400 = vmatprep.subr.bf16.mxu0 0
    %401 = vmatpush2.bf16.msra.mxu0 %v272
    %402 = vmatprep.subr.bf16.mxu0 0
    %403 = vmatpush2.bf16.msra.mxu0 %v271
    %404 = vmatprep.subr.bf16.mxu0 0
    %405 = vmatpush2.bf16.msra.mxu0 %v270
    %406 = vmatprep.mubr.bf16.mxu0 %v99
    %407 = vmatmul.mubr.bf16.gmra.mxu0 %v98
    %v408 = vpop.f32.mrf.mxu0
    %v409 = vadd.f32 %v369, %v408
    %v410 = vpop.f32.mrf.mxu0
    %v411 = vpop.f32.mrf.mxu0
    %v412 = vpop.f32.mrf.mxu0
    %413 = vdwg.mxu0
    %414 = vmatprep.subr.bf16.mxu0 0
    %415 = vmatpush1.bf16.msra.mxu0 %v285
    %416 = vmatprep.subr.bf16.mxu0 0
    %417 = vmatpush1.bf16.msra.mxu0 %v284
    %418 = vmatprep.subr.bf16.mxu0 0
    %419 = vmatpush1.bf16.msra.mxu0 %v283
    %420 = vmatprep.subr.bf16.mxu0 0
    %421 = vmatpush1.bf16.msra.mxu0 %v282
    %422 = vmatprep.subr.bf16.mxu0 0
    %423 = vmatpush1.bf16.msra.mxu0 %v281
    %424 = vmatprep.subr.bf16.mxu0 0
    %425 = vmatpush1.bf16.msra.mxu0 %v280
    %426 = vmatprep.subr.bf16.mxu0 0
    %427 = vmatpush1.bf16.msra.mxu0 %v279
    %428 = vmatprep.subr.bf16.mxu0 0
    %429 = vmatpush1.bf16.msra.mxu0 %v278
    %430 = vmatprep.subr.bf16.mxu0 0
    %431 = vmatpush2.bf16.msra.mxu0 %v293
    %432 = vmatprep.subr.bf16.mxu0 0
    %433 = vmatpush2.bf16.msra.mxu0 %v292
    %434 = vmatprep.subr.bf16.mxu0 0
    %435 = vmatpush2.bf16.msra.mxu0 %v291
    %436 = vmatprep.subr.bf16.mxu0 0
    %437 = vmatpush2.bf16.msra.mxu0 %v290
    %438 = vmatprep.subr.bf16.mxu0 0
    %439 = vmatpush2.bf16.msra.mxu0 %v289
    %440 = vmatprep.subr.bf16.mxu0 0
    %441 = vmatpush2.bf16.msra.mxu0 %v288
    %442 = vmatprep.subr.bf16.mxu0 0
    %443 = vmatpush2.bf16.msra.mxu0 %v287
    %444 = vmatprep.subr.bf16.mxu0 0
    %445 = vmatpush2.bf16.msra.mxu0 %v286
    %446 = vmatprep.mubr.bf16.mxu0 %v101
    %447 = vmatmul.mubr.bf16.gmra.mxu0 %v100
    %v448 = vpop.f32.mrf.mxu0
    %v449 = vadd.f32 %v409, %v448
    %v450 = vpop.f32.mrf.mxu0
    %v451 = vpop.f32.mrf.mxu0
    %v452 = vpop.f32.mrf.mxu0
    %453 = vdwg.mxu0
    %v454 = vadd.f32 %v47, %v449
    %455 = vst [vmem:[#allocation2] sm:$0x3] %v454
    // Predicated region
    $region26: #{tpu_custom_call.1} parent=1 // pred_check
      %p456 = pneg %p42
    $region27: #{tpu_custom_call.1} parent=1 // pred_check_branch
      %458 = sbr.rel (%p456) target = $region29
    $region28: #{tpu_custom_call.1} parent=1 // pred_region
      %v459 = vld [vmem:[#allocation2] sm:$0x3]
      %v460 = vld [vmem:[%s2] sm:$0x1]
      %v462 = vlaneseq
      %v463 = vshrl.u32 %v462, 7
      %v464 = vsub.s32 0, %v463
      %v465 = vrot.slane %v460, %v464
      %v467 = vadd.f32 %v459, %v465
      %v468 = vpack.c.bf16 %v467, %v467
      %469 = vst [vmem:[#allocation8] sm:$0x1] %v468
    $region29: #{tpu_custom_call.1} parent=1 // pred_fallthru
      _
    // Predicated region
    $region30: #{tpu_custom_call.1} parent=1 // pred_check
      _
    $region31: #{tpu_custom_call.1} parent=1 // pred_check_branch
      %471 = sbr.rel (0) target = $region33
    $region32: #{tpu_custom_call.1} parent=1 // pred_region
      %s473 = ssub.s32 16, 16
      %474 = vsyncadd [#allocation5], %s473
      %s476 = sshll.u32 [#allocation8], 4
      %s477 = int_to_ptr.vmem [resolvable:$true] %s476
      %479 = dma.vmem_to_hbm [thread:$0]  %s477, 16, %s3, [#allocation5]
    $region33: #{tpu_custom_call.1} parent=1 // pred_fallthru
      _
    // Predicated region
    $region34: #{tpu_custom_call.1} parent=1 // pred_check
      _
    $region35: #{tpu_custom_call.1} parent=1 // pred_check_branch
      %481 = sbr.rel (0) target = $region37
    $region36: #{tpu_custom_call.1} parent=1 // pred_region
      %482 = dma.done [#allocation5], 16
    $region37: #{tpu_custom_call.1} parent=1 // pred_fallthru
      _
    %483 = vsyncpa [#allocation4], 1
    %484 = vsyncpa [#allocation7], 1
    %485 = vsyncpa [#allocation5], 1

</llo_original>
